<compile_context>
chip_gen: v5e
topology: v5e:2x2
jax: 0.10.0
libtpu: 0.0.40
codegen_flags: <defaults>
</compile_context>

<pallas_src>
import functools

import jax
import jax.numpy as jnp
from jax.experimental import pallas as pl
from jax.experimental.pallas import tpu as pltpu


def _round_up(x, m):
    return (x + m - 1) // m * m


# ----------------------------- kernels ------------------------------------- #

def _stats_kernel(x_ref, w_ref, sum_ref, sq_ref, *, matmul_dtype):
    """Accumulate per-channel sum and sum-of-squares of y = W @ x over row tiles."""
    @pl.when(pl.program_id(0) == 0)
    def _():
        sum_ref[...] = jnp.zeros_like(sum_ref)
        sq_ref[...] = jnp.zeros_like(sq_ref)

    x = x_ref[...].astype(matmul_dtype)              # [Cin, TILE_P]
    w = w_ref[...].astype(matmul_dtype)              # [Cout, Cin]
    y = jnp.dot(w, x, preferred_element_type=jnp.float32)   # [Cout, TILE_P]
    sum_ref[...] += jnp.sum(y, axis=1, keepdims=True)        # [Cout, 1]
    sq_ref[...] += jnp.sum(y * y, axis=1, keepdims=True)     # [Cout, 1]


def _norm_kernel(x_ref, w_ref, scale_ref, shift_ref, o_ref, *, matmul_dtype):
    """Recompute y = W @ x per tile and apply folded BN affine (lane-dense store)."""
    x = x_ref[...].astype(matmul_dtype)
    w = w_ref[...].astype(matmul_dtype)
    y = jnp.dot(w, x, preferred_element_type=jnp.float32)    # [Cout, TILE_P]
    o_ref[...] = (y * scale_ref[...] + shift_ref[...]).astype(o_ref.dtype)


# ----------------------------- wrapper glue --------------------------------- #

def _nchw_to_cols(x, stride):
    """Apply 1x1-conv stride and flatten NCHW -> [C, N*Ho*Wo] (positions on lanes)."""
    xs = x[:, :, ::stride, ::stride]
    n, c, h, w = xs.shape
    return jnp.transpose(xs, (1, 0, 2, 3)).reshape(c, n * h * w), (n, h, w)


def _cols_to_nchw(cols, nhw):
    n, h, w = nhw
    c_out = cols.shape[0]
    return jnp.transpose(cols.reshape(c_out, n, h, w), (1, 0, 2, 3))


def downsample_layer_forward(face, ocular, weight, gamma, beta, *,
                             stride, eps=1e-5, tile_p=512,
                             matmul_dtype=jnp.float32):
    """face, ocular: NCHW float32. weight: [Cout, Cin] (1x1 conv, no bias).

    Returns (face_out, ocular_out) in NCHW, matching the PyTorch module's
    training-mode forward (shared BatchNorm statistics over face+ocular).
    """
    c_out, c_in = weight.shape

    # TODO(synk): fold the conv stride + NCHW->(Cin, P) flatten directly into the
    # BlockSpec index_map to remove these wrapper-side HBM passes.
    f_cols, f_nhw = _nchw_to_cols(face, stride)
    o_cols, o_nhw = _nchw_to_cols(ocular, stride)
    pf = f_cols.shape[1]
    po = o_cols.shape[1]
    p_true = pf + po

    # Row tile: multiple of 128 on the lane axis, clamped to the problem size.
    tile_p = max(128, _round_up(min(tile_p, _round_up(p_true, 128)), 128))
    p_pad = _round_up(p_true, tile_p)
    n_tiles = p_pad // tile_p

    # Unified [Cin, P_pad] slab; zero-padded columns are statistics-neutral.
    x_cols = jnp.concatenate([f_cols, o_cols], axis=1)
    x_cols = jnp.pad(x_cols, ((0, 0), (0, p_pad - p_true)))
    w = weight.astype(jnp.float32)

    vmem_limit = 32 * 1024 * 1024  # explicit; safe on v5e/v6e/v7x for these tiles

    x_spec = pl.BlockSpec((c_in, tile_p), lambda i: (0, i))
    w_spec = pl.BlockSpec((c_out, c_in), lambda i: (0, 0))      # resident
    vec_spec = pl.BlockSpec((c_out, 1), lambda i: (0, 0))       # resident

    # ---- pass 1: accumulate per-channel sum / sumsq of y across row tiles ----
    sum_y, sumsq_y = pl.pallas_call(
        functools.partial(_stats_kernel, matmul_dtype=matmul_dtype),
        out_shape=(jax.ShapeDtypeStruct((c_out, 1), jnp.float32),
                   jax.ShapeDtypeStruct((c_out, 1), jnp.float32)),
        grid_spec=pl.GridSpec(
            grid=(n_tiles,),
            in_specs=[x_spec, w_spec],
            out_specs=(vec_spec, vec_spec),
        ),
        compiler_params=pltpu.CompilerParams(
            dimension_semantics=("arbitrary",),
            vmem_limit_bytes=vmem_limit,
        ),
    )(x_cols, w)

    # ---- tiny per-channel finalize: fold mean/var/gamma/beta into scale/shift ----
    inv_n = jnp.float32(1.0 / p_true)          # divide by true count, not padded
    mean = sum_y * inv_n                                        # [Cout, 1]
    var = jnp.maximum(sumsq_y * inv_n - mean * mean, 0.0)       # biased variance
    inv_std = jax.lax.rsqrt(var + jnp.float32(eps))
    scale = gamma.reshape(c_out, 1).astype(jnp.float32) * inv_std
    shift = beta.reshape(c_out, 1).astype(jnp.float32) - mean * scale

    # ---- pass 2: normalize (embarrassingly parallel over row tiles) ----
    out_cols = pl.pallas_call(
        functools.partial(_norm_kernel, matmul_dtype=matmul_dtype),
        out_shape=jax.ShapeDtypeStruct((c_out, p_pad), face.dtype),
        grid_spec=pl.GridSpec(
            grid=(n_tiles,),
            in_specs=[x_spec, w_spec, vec_spec, vec_spec],
            out_specs=pl.BlockSpec((c_out, tile_p), lambda i: (0, i)),
        ),
        compiler_params=pltpu.CompilerParams(
            dimension_semantics=("parallel",),
            vmem_limit_bytes=vmem_limit,
        ),
    )(x_cols, w, scale, shift)

    face_out = _cols_to_nchw(out_cols[:, :pf], f_nhw)
    ocular_out = _cols_to_nchw(out_cols[:, pf:p_true], o_nhw)
    return face_out, ocular_out


# ----------------------------- reference ------------------------------------ #

def _reference_forward(face, ocular, weight, gamma, beta, *, stride, eps=1e-5):
    """Pure-JAX reference of the PyTorch module (training-mode BN)."""
    def conv1x1(x):
        xs = x[:, :, ::stride, ::stride]
        return jnp.einsum("nchw,oc->nohw", xs, weight)

    yf = conv1x1(face)
    yo = conv1x1(ocular)
    fn, fc, fh, fw = yf.shape
    on, oc, oh, ow = yo.shape
    uni = jnp.concatenate(
        [yf.reshape(fn, fc, 1, fh * fw), yo.reshape(on, oc, 1, oh * ow)], axis=3
    )
    mean = jnp.mean(uni, axis=(0, 2, 3), keepdims=True)
    var = jnp.mean((uni - mean) ** 2, axis=(0, 2, 3), keepdims=True)
    norm = (uni - mean) / jnp.sqrt(var + eps)
    norm = norm * gamma.reshape(1, -1, 1, 1) + beta.reshape(1, -1, 1, 1)
    f_out = norm[:, :, :, : fh * fw].reshape(fn, fc, fh, fw)
    o_out = norm[:, :, :, fh * fw:].reshape(on, oc, oh, ow)
    return f_out, o_out


if __name__ == "__main__":
    key = jax.random.PRNGKey(0)
    k_face, k_ocular, k_w, k_g, k_b = jax.random.split(key, 5)

    batch = 2
    in_planes = 4
    out_planes = 8
    stride = 2
    face = jax.random.normal(k_face, (batch, in_planes, 16, 16), dtype=jnp.float32)
    ocular = jax.random.normal(k_ocular, (batch, in_planes, 8, 8), dtype=jnp.float32)

    # deterministic synthetic parameters (shapes per nn.Conv2d / nn.BatchNorm2d)
    weight = jax.random.normal(k_w, (out_planes, in_planes), dtype=jnp.float32) * 0.5
    gamma = 1.0 + 0.1 * jax.random.normal(k_g, (out_planes,), dtype=jnp.float32)
    beta = 0.1 * jax.random.normal(k_b, (out_planes,), dtype=jnp.float32)

    # tile_p=128 -> P=160 becomes 2 row tiles + 96 zero-padded columns, which
    # exercises the accumulated-stats path and padding invariance at toy sizes.
    face_out, ocular_out = downsample_layer_forward(
        face, ocular, weight, gamma, beta, stride=stride, tile_p=128
    )
    jax.block_until_ready((face_out, ocular_out))

    f_ref, o_ref = _reference_forward(face, ocular, weight, gamma, beta, stride=stride)
    assert face_out.shape == f_ref.shape and ocular_out.shape == o_ref.shape
    assert jnp.allclose(face_out, f_ref, atol=1e-4, rtol=1e-4)
    assert jnp.allclose(ocular_out, o_ref, atol=1e-4, rtol=1e-4)

    print("KERNEL_OK")
</pallas_src>

<mosaic_0001>
module attributes {stable_mosaic.version = 11 : i64} {
  func.func @_stats_kernel(%arg0: i32, %arg1: memref<4x128xf32, #tpu.memory_space<vmem>>, %arg2: memref<8x4xf32, #tpu.memory_space<vmem>>, %arg3: memref<8x1xf32, #tpu.memory_space<vmem>>, %arg4: memref<8x1xf32, #tpu.memory_space<vmem>>) attributes {dimension_semantics = [#tpu.dimension_semantics<arbitrary>], iteration_bounds = array<i64: 2>, scalar_prefetch = 0 : i64, scratch_operands = 0 : i64, tpu.core_type = #tpu.core_type<tc>, window_params = [{transform_indices = @transform_0, window_bounds = array<i64: 4, 128>}, {pipeline_mode = #tpu.pipeline_mode<synchronous>, transform_indices = @transform_1, window_bounds = array<i64: 8, 4>}, {pipeline_mode = #tpu.pipeline_mode<synchronous>, transform_indices = @transform_2, window_bounds = array<i64: 8, 1>}, {pipeline_mode = #tpu.pipeline_mode<synchronous>, transform_indices = @transform_3, window_bounds = array<i64: 8, 1>}]} {
    %c0_i32 = arith.constant 0 : i32
    %0 = arith.cmpi eq, %arg0, %c0_i32 : i32
    %1 = arith.extui %0 : i1 to i32
    %c0_i32_0 = arith.constant 0 : i32
    %2 = arith.cmpi ne, %1, %c0_i32_0 : i32
    scf.if %2 {
      %cst_14 = arith.constant 0.000000e+00 : f32
      %17 = vector.broadcast %cst_14 : f32 to vector<8x1xf32>
      %c0_15 = arith.constant 0 : index
      %c0_16 = arith.constant 0 : index
      %18 = vector.load %arg3[%c0_15, %c0_16] : memref<8x1xf32, #tpu.memory_space<vmem>>, vector<8x1xf32>
      tpu.vector_store %arg3[%c0_15, %c0_16], %17 {strides = array<i32>} : memref<8x1xf32, #tpu.memory_space<vmem>>, vector<8x1xf32>,
      %cst_17 = arith.constant 0.000000e+00 : f32
      %19 = vector.broadcast %cst_17 : f32 to vector<8x1xf32>
      %c0_18 = arith.constant 0 : index
      %c0_19 = arith.constant 0 : index
      %20 = vector.load %arg4[%c0_18, %c0_19] : memref<8x1xf32, #tpu.memory_space<vmem>>, vector<8x1xf32>
      tpu.vector_store %arg4[%c0_18, %c0_19], %19 {strides = array<i32>} : memref<8x1xf32, #tpu.memory_space<vmem>>, vector<8x1xf32>,
    } else {
    }
    %c0 = arith.constant 0 : index
    %c0_1 = arith.constant 0 : index
    %3 = vector.load %arg1[%c0, %c0_1] : memref<4x128xf32, #tpu.memory_space<vmem>>, vector<4x128xf32>
    %c0_2 = arith.constant 0 : index
    %c0_3 = arith.constant 0 : index
    %4 = vector.load %arg2[%c0_2, %c0_3] : memref<8x4xf32, #tpu.memory_space<vmem>>, vector<8x4xf32>
    %cst = arith.constant dense<0.000000e+00> : vector<8x128xf32>
    %5 = tpu.matmul %4, %3, %cst {dimension_numbers = #tpu.dot_dimension_numbers<[1], [0], [0], [1], [0, 0, 1, 1], [], []>} : vector<8x4xf32>, vector<4x128xf32>, vector<8x128xf32> -> vector<8x128xf32>
    %c0_4 = arith.constant 0 : index
    %c0_5 = arith.constant 0 : index
    %6 = vector.load %arg3[%c0_4, %c0_5] : memref<8x1xf32, #tpu.memory_space<vmem>>, vector<8x1xf32>
    %cst_6 = arith.constant dense<0.000000e+00> : vector<8xf32>
    %7 = vector.multi_reduction <add>, %5, %cst_6 [1] : vector<8x128xf32> to vector<8xf32>
    %8 = vector.shape_cast %7 : vector<8xf32> to vector<8x1xf32>
    %9 = arith.addf %6, %8 : vector<8x1xf32>
    %c0_7 = arith.constant 0 : index
    %c0_8 = arith.constant 0 : index
    %10 = vector.load %arg3[%c0_7, %c0_8] : memref<8x1xf32, #tpu.memory_space<vmem>>, vector<8x1xf32>
    tpu.vector_store %arg3[%c0_7, %c0_8], %9 {strides = array<i32>} : memref<8x1xf32, #tpu.memory_space<vmem>>, vector<8x1xf32>,
    %c0_9 = arith.constant 0 : index
    %c0_10 = arith.constant 0 : index
    %11 = vector.load %arg4[%c0_9, %c0_10] : memref<8x1xf32, #tpu.memory_space<vmem>>, vector<8x1xf32>
    %12 = arith.mulf %5, %5 : vector<8x128xf32>
    %cst_11 = arith.constant dense<0.000000e+00> : vector<8xf32>
    %13 = vector.multi_reduction <add>, %12, %cst_11 [1] : vector<8x128xf32> to vector<8xf32>
    %14 = vector.shape_cast %13 : vector<8xf32> to vector<8x1xf32>
    %15 = arith.addf %11, %14 : vector<8x1xf32>
    %c0_12 = arith.constant 0 : index
    %c0_13 = arith.constant 0 : index
    %16 = vector.load %arg4[%c0_12, %c0_13] : memref<8x1xf32, #tpu.memory_space<vmem>>, vector<8x1xf32>
    tpu.vector_store %arg4[%c0_12, %c0_13], %15 {strides = array<i32>} : memref<8x1xf32, #tpu.memory_space<vmem>>, vector<8x1xf32>,
    return
  }
  func.func @transform_0(%arg0: i32) -> (i32, i32) {
    %c0_i32 = arith.constant 0 : i32
    %c0_i32_0 = arith.constant 0 : i32
    return %c0_i32, %arg0 : i32, i32
  }
  func.func @transform_1(%arg0: i32) -> (i32, i32) {
    %c0_i32 = arith.constant 0 : i32
    %c0_i32_0 = arith.constant 0 : i32
    %c0_i32_1 = arith.constant 0 : i32
    return %c0_i32, %c0_i32_0 : i32, i32
  }
  func.func @transform_2(%arg0: i32) -> (i32, i32) {
    %c0_i32 = arith.constant 0 : i32
    %c0_i32_0 = arith.constant 0 : i32
    %c0_i32_1 = arith.constant 0 : i32
    return %c0_i32, %c0_i32_0 : i32, i32
  }
  func.func @transform_3(%arg0: i32) -> (i32, i32) {
    %c0_i32 = arith.constant 0 : i32
    %c0_i32_0 = arith.constant 0 : i32
    %c0_i32_1 = arith.constant 0 : i32
    return %c0_i32, %c0_i32_0 : i32, i32
  }
}

</mosaic_0001>

<llo_original>
// kernel: tpu_custom_call.1
$region0: #{tpu_custom_call.1}
  #allocation0 [shape = 'u32[]', space=smem, size = 0x4, offset = 0x4, fixed_abs, tag = 'smem constant byte address 0x4 - core index']
  #allocation1 [shape = 'u32[72,128]{1,0:T(1,128)}', space=vmem, size = 0x9000, scoped, tag = 'internal scratch']
  %s0 = inlined_call_operand.vmem [shape: f32[4,256], index: 0, kind: input, shape index: {}]
  %s1 = inlined_call_operand.vmem [shape: f32[8,4], index: 1, kind: input, shape index: {}]
  %s2 = inlined_call_operand.vmem [shape: f32[8,1], index: 2, kind: output, shape index: {0}]
  %s3 = inlined_call_operand.vmem [shape: f32[8,1], index: 3, kind: output, shape index: {1}]
  %4 = xla_tuple %s2, %s3
  %s5 = sld [smem:[#allocation0]]
  $region53: #{tpu_custom_call.1} parent=0
    _
  %s7 = ssub.s32 1, %s5
  %s8 = scalar_select 0, %s7, %s5
  loop: start=0, step=1, limit=4
  $region2: #{tpu_custom_call.1} parent=0 // loop_pre_header
    _
  $region3: #{tpu_custom_call.1} parent=0 // loop_header
    %s10 = sphi 0, %s14
    %p11 = scmp.ge.s32.totalorder %s10, 4
    %s20 = sphi 0, %s22
    %s23 = sphi 0, %s20
    %s24 = sphi 0, %s23
    %s40 = sphi 0, %s24
    %s44 = sphi 0, %s44
    %s46 = sphi 0, %s44
    %s47 = sphi 0, %s46
    %s61 = sphi 0, %s47
    %s65 = sphi 0, %s65
    %s67 = sphi 0, %s65
    %s68 = sphi 0, %s67
    %s82 = sphi 0, %s68
    %s86 = sphi 0, %s86
    %s88 = sphi 0, %s86
    %s89 = sphi 0, %s88
    %s103 = sphi 0, %s89
  $region4: #{tpu_custom_call.1} parent=0 // loop_header_branch
    %13 = sbr.rel (%p11) target = $region8
  $region5: #{tpu_custom_call.1} parent=0 // loop_body
    %s15 = ssub.s32 %s10, 1
    %s16 = ssub.s32 %s10, 2
    %s17 = sadd.s32 %s10, 1
    %s18 = ssub.s32 %s10, %s17
    %p19 = scmp.eq.s32.totalorder %s18, 0
    %s21 = sadd.s32 %s20, 1
    %s22 = scalar_select %p19, %s20, %s21
    %p25 = pneg %p19
    %p26 = scmp.eq.s32.totalorder %s10, 1
    %p27 = por %p25, %p26
    %p28 = scmp.ne.s32.totalorder %s20, %s23
    %p29 = scmp.eq.s32.totalorder %s10, 0
    %p30 = por %p28, %p29
    %p31 = scmp.ne.s32.totalorder %s20, %s23
    %p32 = scmp.eq.s32.totalorder %s15, 1
    %p33 = por %p31, %p32
    %p34 = scmp.ne.s32.totalorder %s23, %s24
    %p35 = scmp.eq.s32.totalorder %s15, 0
    %p36 = por %p34, %p35
    %p37 = scmp.ne.s32.totalorder %s23, %s24
    %p38 = scmp.eq.s32.totalorder %s16, 1
    %p39 = por %p37, %p38
    %p41 = scmp.ne.s32.totalorder %s24, %s40
    %p42 = scmp.eq.s32.totalorder %s16, 0
    %p43 = por %p41, %p42
    %s45 = sadd.s32 %s44, 1
    %p48 = scmp.eq.s32.totalorder %s10, 1
    %p49 = scmp.ne.s32.totalorder %s44, %s46
    %p50 = scmp.eq.s32.totalorder %s10, 0
    %p51 = por %p49, %p50
    %p52 = scmp.ne.s32.totalorder %s44, %s46
    %p53 = scmp.eq.s32.totalorder %s15, 1
    %p54 = por %p52, %p53
    %p55 = scmp.ne.s32.totalorder %s46, %s47
    %p56 = scmp.eq.s32.totalorder %s15, 0
    %p57 = por %p55, %p56
    %p58 = scmp.ne.s32.totalorder %s46, %s47
    %p59 = scmp.eq.s32.totalorder %s16, 1
    %p60 = por %p58, %p59
    %p62 = scmp.ne.s32.totalorder %s47, %s61
    %p63 = scmp.eq.s32.totalorder %s16, 0
    %p64 = por %p62, %p63
    %s66 = sadd.s32 %s65, 1
    %p69 = scmp.eq.s32.totalorder %s10, 1
    %p70 = scmp.ne.s32.totalorder %s65, %s67
    %p71 = scmp.eq.s32.totalorder %s10, 0
    %p72 = por %p70, %p71
    %p73 = scmp.ne.s32.totalorder %s65, %s67
    %p74 = scmp.eq.s32.totalorder %s15, 1
    %p75 = por %p73, %p74
    %p76 = scmp.ne.s32.totalorder %s67, %s68
    %p77 = scmp.eq.s32.totalorder %s15, 0
    %p78 = por %p76, %p77
    %p79 = scmp.ne.s32.totalorder %s67, %s68
    %p80 = scmp.eq.s32.totalorder %s16, 1
    %p81 = por %p79, %p80
    %p83 = scmp.ne.s32.totalorder %s68, %s82
    %p84 = scmp.eq.s32.totalorder %s16, 0
    %p85 = por %p83, %p84
    %s87 = sadd.s32 %s86, 1
    %p90 = scmp.eq.s32.totalorder %s10, 1
    %p91 = scmp.ne.s32.totalorder %s86, %s88
    %p92 = scmp.eq.s32.totalorder %s10, 0
    %p93 = por %p91, %p92
    %p94 = scmp.ne.s32.totalorder %s86, %s88
    %p95 = scmp.eq.s32.totalorder %s15, 1
    %p96 = por %p94, %p95
    %p97 = scmp.ne.s32.totalorder %s88, %s89
    %p98 = scmp.eq.s32.totalorder %s15, 0
    %p99 = por %p97, %p98
    %p100 = scmp.ne.s32.totalorder %s88, %s89
    %p101 = scmp.eq.s32.totalorder %s16, 1
    %p102 = por %p100, %p101
    %p104 = scmp.ne.s32.totalorder %s89, %s103
    %p105 = scmp.eq.s32.totalorder %s16, 0
    %p106 = por %p104, %p105
    %p107 = scmp.le.s32.totalorder 1, %s10
    %p108 = scmp.lt.s32.totalorder %s10, 3
    %p109 = pnand %p107, %p108
    %p110 = pneg %p109
    // Predicated region
    $region9: #{tpu_custom_call.1} parent=5 // pred_check
      _
    $region10: #{tpu_custom_call.1} parent=5 // pred_check_branch
      %112 = sbr.rel (%p109) target = $region12
    $region11: #{tpu_custom_call.1} parent=5 // pred_region
      %s113 = ssub.s32 %s10, 1
      // Predicated region
      $region13: #{tpu_custom_call.1} parent=11 // pred_check
        %p114 = pneg %p57
      $region14: #{tpu_custom_call.1} parent=11 // pred_check_branch
        %116 = sbr.rel (%p114) target = $region16
      $region15: #{tpu_custom_call.1} parent=11 // pred_region
        _
      $region16: #{tpu_custom_call.1} parent=11 // pred_fallthru
        _
    $region12: #{tpu_custom_call.1} parent=5 // pred_fallthru
      _
    %p117 = scmp.lt.s32.totalorder %s10, 2
    // Predicated region
    $region17: #{tpu_custom_call.1} parent=5 // pred_check
      %p118 = pneg %p117
    $region18: #{tpu_custom_call.1} parent=5 // pred_check_branch
      %120 = sbr.rel (%p118) target = $region20
    $region19: #{tpu_custom_call.1} parent=5 // pred_region
      // Predicated region
      $region21: #{tpu_custom_call.1} parent=19 // pred_check
        %p121 = pneg %p30
      $region22: #{tpu_custom_call.1} parent=19 // pred_check_branch
        %123 = sbr.rel (%p121) target = $region24
      $region23: #{tpu_custom_call.1} parent=19 // pred_region
        %p124 = scmp.lt.s32.totalorder %s10, 1
        %s125 = scalar_select %p124, %s10, 1
        %s126 = smul.addr %s125, 4
        %s127 = scalar_lea.vmem %s0, %s126
      $region24: #{tpu_custom_call.1} parent=19 // pred_fallthru
        _
    $region20: #{tpu_custom_call.1} parent=5 // pred_fallthru
      _
    %p128 = scmp.le.s32.totalorder 1, %s10
    %p129 = scmp.lt.s32.totalorder %s10, 3
    %p130 = pnand %p128, %p129
    %p131 = pneg %p130
    // Predicated region
    $region25: #{tpu_custom_call.1} parent=5 // pred_check
      _
    $region26: #{tpu_custom_call.1} parent=5 // pred_check_branch
      %133 = sbr.rel (%p130) target = $region28
    $region27: #{tpu_custom_call.1} parent=5 // pred_region
      %s134 = ssub.s32 %s10, 1
      %p135 = scmp.lt.s32.totalorder %s15, 1
      %s136 = scalar_select %p135, %s15, 1
      %s137 = smul.addr %s136, 4
      %s138 = scalar_lea.vmem %s0, %s137
      %p139 = pneg %p36
      %p140 = pneg %p33
      %p141 = pneg %p57
      %p142 = pneg %p54
      %p143 = pneg %p78
      %p144 = pneg %p75
      %p145 = pneg %p99
      %p146 = pneg %p96
      %p147 = scmp.lt.s32.totalorder %s15, 1
      %s148 = scalar_select %p147, %s15, 1
      %s149 = smul.addr %s148, 4
      %s150 = scalar_lea.vmem %s0, %s149
      %p151 = scmp.eq.s32.totalorder %s15, 0
      // Predicated region
      $region29: #{tpu_custom_call.1} parent=27 // pred_check
        %p152 = pneg %p151
      $region30: #{tpu_custom_call.1} parent=27 // pred_check_branch
        %154 = sbr.rel (%p152) target = $region32
      $region31: #{tpu_custom_call.1} parent=27 // pred_region
        %vm155 = vcmask 7168
        %156 = vst.msk [vmem:[%s2] sm:$0xff] %vm155, 0.0
        %157 = vst.msk [vmem:[%s3] sm:$0xff] %vm155, 0.0
      $region32: #{tpu_custom_call.1} parent=27 // pred_fallthru
        _
      %v158 = vld [vmem:[%s150] sm:$0xf]
      %v159 = vld [vmem:[%s1] sm:$0xff]
      %vm160 = vcmask 31744
      %v162 = vsel %vm160, %v159, 0
      %vm164 = vcmask 1043456
      %v166 = vsel %vm164, %v158, 0
      %168 = vmatpush.msra.mxu0 0.0
      %169 = vmatpush.msra.mxu0 0.0
      %170 = vmatpush.msra.mxu0 0.0
      %171 = vmatpush.msra.mxu0 0.0
      %172 = vmatpush.msra.mxu0 0.0
      %173 = vmatpush.msra.mxu0 0.0
      %174 = vmatpush.msra.mxu0 0.0
      %175 = vmatpush.msra.mxu0 0.0
      %176 = vmatpush.msra.mxu0 0.0
      %177 = vmatpush.msra.mxu0 0.0
      %178 = vmatpush.msra.mxu0 0.0
      %179 = vmatpush.msra.mxu0 0.0
      %180 = vmatpush.msra.mxu0 0.0
      %181 = vmatpush.msra.mxu0 0.0
      %182 = vmatpush.msra.mxu0 0.0
      %183 = vmatpush.msra.mxu0 %v166
      %184 = vmatmul.f32.gmra.mxu0 %v162
      %v185 = vpop.f32.mrf.mxu0
      %v186 = vadd.f32 0.0, %v185
      %187 = vdwg.mxu0
      %v188 = vld [vmem:[%s2] sm:$0xff]
      %189 = vadd.xlane.f32.xlu0 %v186
      %v190 = vpop.xlane.xlu0 %189
      %v191 = vadd.f32 %v188, %v190
      %vm192 = vcmask 7168
      %193 = vst.msk [vmem:[%s2] sm:$0xff] %vm192, %v191
      %v194 = vld [vmem:[%s3] sm:$0xff]
      %v195 = vmul.f32 %v186, %v186
      %196 = vadd.xlane.f32.xlu0 %v195
      %v197 = vpop.xlane.xlu0 %196
      %v198 = vadd.f32 %v194, %v197
      %199 = vst.msk [vmem:[%s3] sm:$0xff] %vm192, %v198
      // Predicated region
      $region33: #{tpu_custom_call.1} parent=27 // pred_check
        %p200 = pneg %p75
      $region34: #{tpu_custom_call.1} parent=27 // pred_check_branch
        %202 = sbr.rel (%p200) target = $region36
      $region35: #{tpu_custom_call.1} parent=27 // pred_region
        _
      $region36: #{tpu_custom_call.1} parent=27 // pred_fallthru
        _
      // Predicated region
      $region37: #{tpu_custom_call.1} parent=27 // pred_check
        %p203 = pneg %p96
      $region38: #{tpu_custom_call.1} parent=27 // pred_check_branch
        %205 = sbr.rel (%p203) target = $region40
      $region39: #{tpu_custom_call.1} parent=27 // pred_region
        _
      $region40: #{tpu_custom_call.1} parent=27 // pred_fallthru
        _
      // Predicated region
      $region41: #{tpu_custom_call.1} parent=27 // pred_check
        %p206 = pneg %p75
      $region42: #{tpu_custom_call.1} parent=27 // pred_check_branch
        %208 = sbr.rel (%p206) target = $region44
      $region43: #{tpu_custom_call.1} parent=27 // pred_region
        _
      $region44: #{tpu_custom_call.1} parent=27 // pred_fallthru
        _
      // Predicated region
      $region45: #{tpu_custom_call.1} parent=27 // pred_check
        %p209 = pneg %p96
      $region46: #{tpu_custom_call.1} parent=27 // pred_check_branch
        %211 = sbr.rel (%p209) target = $region48
      $region47: #{tpu_custom_call.1} parent=27 // pred_region
        _
      $region48: #{tpu_custom_call.1} parent=27 // pred_fallthru
        _
    $region28: #{tpu_custom_call.1} parent=5 // pred_fallthru
      _
    %p212 = scmp.le.s32.totalorder 2, %s10
    // Predicated region
    $region49: #{tpu_custom_call.1} parent=5 // pred_check
      %p213 = pneg %p212
    $region50: #{tpu_custom_call.1} parent=5 // pred_check_branch
      %215 = sbr.rel (%p213) target = $region52
    $region51: #{tpu_custom_call.1} parent=5 // pred_region
      %s216 = ssub.s32 %s10, 2
    $region52: #{tpu_custom_call.1} parent=5 // pred_fallthru
      _
  $region6: #{tpu_custom_call.1} parent=0 // loop_footer
    %s14 = sadd.s32 1, %s10
  $region7: #{tpu_custom_call.1} parent=0 // loop_footer_branch
    %9 = sbr.rel target = $region3
  $region8: #{tpu_custom_call.1} parent=0 // loop_exit
    _

</llo_original>
